<compile_context>
chip_gen: v7x
topology: tpu7x:2x2x1
jax: 0.10.0
libtpu: 0.0.40
codegen_flags: <defaults>
</compile_context>

<pallas_src>
import functools

import jax
import jax.numpy as jnp
from jax import lax
from jax.experimental import pallas as pl
from jax.experimental.pallas import tpu as pltpu


# --------------------------------------------------------------------------
# VMEM budgeting (generation-aware, conservative fallback = v7x 64 MiB/core).
# --------------------------------------------------------------------------
def _ceil_to(v, m):
    return ((v + m - 1) // m) * m


def _vmem_budget_bytes():
    cap = None
    try:
        info = pltpu.get_tpu_info()
        for name in ("vmem_capacity_bytes", "vmem_bytes", "vmem_size_bytes"):
            v = getattr(info, name, None)
            if v:
                cap = int(v)
                break
    except Exception:
        cap = None
    if not cap:
        cap = 64 * 1024 * 1024          # v7x per-TensorCore VMEM (tightest)
    # 3/4 of physical, capped well under the 128 MiB parts.
    return min(cap * 3 // 4, 96 * 1024 * 1024)


# --------------------------------------------------------------------------
# Tile pickers (budget on padded tiles so double-buffering always fits).
# --------------------------------------------------------------------------
def _pick_tiles_4d(half, C, L, work_bytes, tile_budget):
    """Tiles for the (1, TN, C, TL) stats / fallback-normalize blocks."""
    padC = _ceil_to(C, 8)
    full_row = padC * _ceil_to(L, 128) * work_bytes
    if full_row <= tile_budget:
        tl = L
    else:
        tl = None
        for d in range(128, L, 128):              # multiple-of-128 divisors of L
            if L % d == 0 and padC * d * work_bytes <= tile_budget:
                tl = d                             # keep the largest fitting one
        if tl is None:
            # Nothing under budget: take the smallest legal lane tile; the
            # vmem limit keeps ~8x headroom over tile_budget.
            for d in range(128, L, 128):
                if L % d == 0:
                    tl = d
                    break
            else:
                tl = L
    per_row = padC * _ceil_to(tl, 128) * work_bytes
    tn = max(1, min(half, tile_budget // per_row))
    while half % tn:
        tn -= 1
    return tn, tl


def _pick_flat_tiles(half, CL, work_bytes, tile_budget):
    """Tiles for the lane-dense (1, TNf, TLF) normalize blocks, or None."""
    pad_row = _ceil_to(CL, 128) * work_bytes
    # Case 1: whole (C*L) rows per lane tile.
    max_rows = tile_budget // pad_row
    if max_rows >= half:
        return half, CL
    if max_rows >= 8:
        tn = (max_rows // 8) * 8
        while tn >= 8 and half % tn:
            tn -= 8
        if tn >= 8:
            return tn, CL
    # Case 2: split rows on 128-lane boundaries.
    if CL % 128:
        return None
    if half % 8 == 0:
        tn = 8
    elif half < 8:
        tn = half
    else:
        return None
    tlf = (tile_budget // (_ceil_to(tn, 8) * work_bytes)) // 128 * 128
    tlf = min(tlf, CL)
    while tlf >= 128 and CL % tlf:
        tlf -= 128
    return (tn, tlf) if tlf >= 128 else None


# --------------------------------------------------------------------------
# Kernels
# --------------------------------------------------------------------------
def _dsbn_fused_kernel(eps, count, gb_ref, x_ref, o_ref):
    """Single-pass BN over a VMEM-resident per-domain slab (true 2-pass var)."""
    x = x_ref[0].astype(jnp.float32)                       # (half, C, L)
    inv_count = jnp.float32(1.0 / count)
    xs = jnp.sum(x, axis=0)                                # (C, L)  VPU adds
    mean = jnp.sum(xs, axis=-1, keepdims=True) * inv_count  # (C, 1)
    d = x - mean
    ds = jnp.sum(d * d, axis=0)                            # (C, L)
    var = jnp.sum(ds, axis=-1, keepdims=True) * inv_count  # (C, 1)
    gamma = gb_ref[0, 0]                                   # (C, 1)
    beta = gb_ref[0, 1]                                    # (C, 1)
    scale = gamma * lax.rsqrt(var + jnp.float32(eps))
    o_ref[0] = (d * scale + beta).astype(o_ref.dtype)


def _dsbn_stats_kernel(x_ref, s_ref):
    """Per-domain per-channel sum / sum-of-squares (resident accumulator)."""
    n = pl.program_id(1)
    l = pl.program_id(2)

    @pl.when(jnp.logical_and(n == 0, l == 0))
    def _():
        s_ref[...] = jnp.zeros_like(s_ref)

    x = x_ref[0].astype(jnp.float32)                       # (TN, C, TL)
    # Reduce over the batch tile first with pure VPU adds, then do a single
    # cross-lane reduce per tile (keeps XLU work ~TN x lower).
    xs = jnp.sum(x, axis=0)                                # (C, TL)
    xq = jnp.sum(x * x, axis=0)                            # (C, TL)
    s_ref[0, 0] += jnp.sum(xs, axis=-1, keepdims=True)     # (C, 1)
    s_ref[0, 1] += jnp.sum(xq, axis=-1, keepdims=True)     # (C, 1)


def _dsbn_norm_flat_kernel(ss_ref, x_ref, o_ref):
    """Lane-dense y = x * scale + shift on the flattened (half, C*L) view."""
    x = x_ref[0].astype(jnp.float32)                       # (TNf, TLF)
    ss = ss_ref[0]                                         # (2, TLF) f32
    o_ref[0] = (x * ss[0:1, :] + ss[1:2, :]).astype(o_ref.dtype)


def _dsbn_norm_kernel(ss_ref, x_ref, o_ref):
    """Fallback per-channel normalize in the native (TN, C, TL) layout."""
    x = x_ref[0].astype(jnp.float32)                       # (TN, C, TL)
    ss = ss_ref[0]                                         # (2, C, 1)
    o_ref[0] = (x * ss[0] + ss[1]).astype(o_ref.dtype)


# --------------------------------------------------------------------------
# Wrapper
# --------------------------------------------------------------------------
def dsbn2d_train_forward(x, gamma_s, beta_s, gamma_t, beta_t, *, eps=1e-5,
                         force_tiled=False, donate_x=False):
    """DSBN2d forward (training mode). x: (N, C, H, W) with N even."""
    N, C, H, W = x.shape
    assert N % 2 == 0, "DSBN2d training forward requires an even batch"
    half = N // 2
    L = H * W
    elt = jnp.dtype(x.dtype).itemsize
    work = max(4, elt)                      # budget in f32 working precision

    # Pure reshape (no data movement): NCHW row-major -> (domain, N/2, C, H*W).
    x4 = x.reshape(2, half, C, L)

    vmem_limit = _vmem_budget_bytes()
    tile_budget = max(512 * 1024, vmem_limit // 8)
    alias = ({1: 0} if donate_x else {})    # alias x to out when caller allows

    gamma = jnp.stack([gamma_s, gamma_t], axis=0).astype(jnp.float32)  # (2, C)
    beta = jnp.stack([beta_s, beta_t], axis=0).astype(jnp.float32)     # (2, C)

    # ---------------- single-pass VMEM-resident fast path -------------------
    pad_slab = half * _ceil_to(C, 8) * _ceil_to(L, 128)
    # 2x in + 2x out block buffers (double-buffered over the 2 domains) plus
    # one f32-slab temporary for the centered values.
    fused_vmem = pad_slab * (4 * elt + 8)
    if (not force_tiled) and fused_vmem <= (vmem_limit * 9) // 10:
        gb = jnp.stack([gamma, beta], axis=1)[..., None]   # (2, 2, C, 1)
        kernel = functools.partial(_dsbn_fused_kernel, float(eps),
                                   float(half * L))
        out = pl.pallas_call(
            kernel,
            out_shape=jax.ShapeDtypeStruct((2, half, C, L), x.dtype),
            grid_spec=pltpu.PrefetchScalarGridSpec(
                num_scalar_prefetch=0,
                grid=(2,),
                in_specs=[
                    pl.BlockSpec((1, 2, C, 1), lambda d: (d, 0, 0, 0)),
                    pl.BlockSpec((1, half, C, L), lambda d: (d, 0, 0, 0)),
                ],
                out_specs=pl.BlockSpec((1, half, C, L), lambda d: (d, 0, 0, 0)),
            ),
            compiler_params=pltpu.CompilerParams(
                dimension_semantics=("parallel",),       # 1 domain / TC on v7x
                vmem_limit_bytes=vmem_limit),
            input_output_aliases=alias,
        )(gb, x4)
        return out.reshape(N, C, H, W)

    # ---------------- tiled two-pass path ------------------------------------
    TN, TL = _pick_tiles_4d(half, C, L, work, tile_budget)
    nN, nL = half // TN, L // TL

    # Pass 1: per-domain per-channel sum / sum-of-squares.
    stats = pl.pallas_call(
        _dsbn_stats_kernel,
        out_shape=jax.ShapeDtypeStruct((2, 2, C, 1), jnp.float32),
        grid_spec=pltpu.PrefetchScalarGridSpec(
            num_scalar_prefetch=0,
            grid=(2, nN, nL),
            in_specs=[pl.BlockSpec((1, TN, C, TL), lambda d, n, l: (d, n, 0, l))],
            out_specs=pl.BlockSpec((1, 2, C, 1), lambda d, n, l: (d, 0, 0, 0)),
        ),
        compiler_params=pltpu.CompilerParams(
            dimension_semantics=("parallel", "arbitrary", "arbitrary"),
            vmem_limit_bytes=vmem_limit),
    )(x4)

    # Fold stats + affine params into per-channel scale/shift (tiny O(C) work).
    count = jnp.float32(half * L)
    sums = stats[:, 0, :, 0]                               # (2, C)
    sumsq = stats[:, 1, :, 0]                              # (2, C)
    mean = sums / count
    # TODO(synk): E[x^2]-E[x]^2 can lose precision when |mean| >> std; the
    # fused VMEM-resident path above uses a true two-pass variance instead.
    var = jnp.maximum(sumsq / count - mean * mean, 0.0)
    inv_std = lax.rsqrt(var + jnp.float32(eps))
    scale = gamma * inv_std                                # (2, C)
    shift = beta - mean * scale                            # (2, C)

    # Pass 2 (preferred): lane-dense normalize on the flattened (half, C*L)
    # view with pre-broadcast per-element scale/shift.
    CL = C * L
    flat = _pick_flat_tiles(half, CL, work, tile_budget)
    if flat is not None:
        TNf, TLF = flat
        nNf, nLF = half // TNf, CL // TLF
        x3 = x4.reshape(2, half, CL)
        ss_full = jnp.repeat(jnp.stack([scale, shift], axis=1), L, axis=-1)
        out = pl.pallas_call(
            _dsbn_norm_flat_kernel,
            out_shape=jax.ShapeDtypeStruct((2, half, CL), x.dtype),
            grid_spec=pltpu.PrefetchScalarGridSpec(
                num_scalar_prefetch=0,
                # batch tile innermost -> the ss tile keeps the same block
                # index across consecutive steps and is not re-fetched.
                grid=(2, nLF, nNf),
                in_specs=[
                    pl.BlockSpec((1, 2, TLF), lambda d, l, n: (d, 0, l)),
                    pl.BlockSpec((1, TNf, TLF), lambda d, l, n: (d, n, l)),
                ],
                out_specs=pl.BlockSpec((1, TNf, TLF), lambda d, l, n: (d, n, l)),
            ),
            compiler_params=pltpu.CompilerParams(
                dimension_semantics=("parallel", "arbitrary", "arbitrary"),
                vmem_limit_bytes=vmem_limit),
            input_output_aliases=alias,
        )(ss_full, x3)
        return out.reshape(N, C, H, W)

    # Pass 2 (fallback): per-channel broadcast in the native 4-D layout.
    ss = jnp.stack([scale, shift], axis=1)[..., None]      # (2, 2, C, 1)
    out = pl.pallas_call(
        _dsbn_norm_kernel,
        out_shape=jax.ShapeDtypeStruct((2, half, C, L), x.dtype),
        grid_spec=pltpu.PrefetchScalarGridSpec(
            num_scalar_prefetch=0,
            grid=(2, nN, nL),
            in_specs=[
                pl.BlockSpec((1, 2, C, 1), lambda d, n, l: (d, 0, 0, 0)),
                pl.BlockSpec((1, TN, C, TL), lambda d, n, l: (d, n, 0, l)),
            ],
            out_specs=pl.BlockSpec((1, TN, C, TL), lambda d, n, l: (d, n, 0, l)),
        ),
        compiler_params=pltpu.CompilerParams(
            dimension_semantics=("parallel", "parallel", "parallel"),
            vmem_limit_bytes=vmem_limit),
        input_output_aliases=alias,
    )(ss, x4)
    return out.reshape(N, C, H, W)


# --------------------------------------------------------------------------
# Pure-JAX reference (PyTorch BatchNorm2d training semantics, per domain).
# --------------------------------------------------------------------------
def _reference_dsbn2d_train(x, gamma_s, beta_s, gamma_t, beta_t, eps=1e-5):
    N = x.shape[0]
    half = N // 2

    def bn(xh, g, b):
        mean = jnp.mean(xh, axis=(0, 2, 3), keepdims=True)
        var = jnp.mean(jnp.square(xh - mean), axis=(0, 2, 3), keepdims=True)
        g = g.reshape(1, -1, 1, 1)
        b = b.reshape(1, -1, 1, 1)
        return (xh - mean) * lax.rsqrt(var + eps) * g + b

    out_s = bn(x[:half], gamma_s, beta_s)
    out_t = bn(x[half:], gamma_t, beta_t)
    return jnp.concatenate([out_s, out_t], axis=0)


if __name__ == "__main__":
    key = jax.random.PRNGKey(0)

    def make_case(k, N, C, H, W):
        k_x, k_gs, k_bs, k_gt, k_bt = jax.random.split(k, 5)
        x = jax.random.normal(k_x, (N, C, H, W), dtype=jnp.float32)
        gamma_s = 1.0 + 0.1 * jax.random.normal(k_gs, (C,), dtype=jnp.float32)
        beta_s = 0.1 * jax.random.normal(k_bs, (C,), dtype=jnp.float32)
        gamma_t = 1.0 + 0.1 * jax.random.normal(k_gt, (C,), dtype=jnp.float32)
        beta_t = 0.1 * jax.random.normal(k_bt, (C,), dtype=jnp.float32)
        return x, gamma_s, beta_s, gamma_t, beta_t

    k1, k2 = jax.random.split(key)
    cases = [
        make_case(k1, 2, 4, 16, 16),   # H*W multiple of 128
        make_case(k2, 4, 3, 7, 7),     # H*W = 49 -> exercises lane padding
    ]

    for args in cases:
        ref = _reference_dsbn2d_train(*args)
        for force_tiled in (False, True):   # exercise both the fused and tiled paths
            out = dsbn2d_train_forward(*args, force_tiled=force_tiled)
            out = jax.block_until_ready(out)
            assert out.shape == args[0].shape
            assert jnp.allclose(out, ref, atol=1e-4, rtol=1e-4), (
                f"mismatch (force_tiled={force_tiled}, shape={args[0].shape})")

    # TODO(synk): eval-mode branch (BN_T with stored running_mean/var) and the
    # running-stat momentum update are stateful buffer ops not implemented here;
    # the training forward is the module's distinctive path.
    print("KERNEL_OK")
</pallas_src>

<mosaic_0001>
module attributes {stable_mosaic.version = 11 : i64} {
  func.func @_dsbn_fused_kernel(%arg0: i32, %arg1: memref<1x2x4x1xf32, #tpu.memory_space<vmem>>, %arg2: memref<1x1x4x256xf32, #tpu.memory_space<vmem>>, %arg3: memref<1x1x4x256xf32, #tpu.memory_space<vmem>>) attributes {dimension_semantics = [#tpu.dimension_semantics<parallel>], iteration_bounds = array<i64: 2>, scalar_prefetch = 0 : i64, scratch_operands = 0 : i64, tpu.core_type = #tpu.core_type<tc>, window_params = [{transform_indices = @transform_0, window_bounds = array<i64: 1, 2, 4, 1>}, {transform_indices = @transform_1, window_bounds = array<i64: 1, 1, 4, 256>}, {transform_indices = @transform_2, window_bounds = array<i64: 1, 1, 4, 256>}]} {
    %c0 = arith.constant 0 : index
    %c0_0 = arith.constant 0 : index
    %c0_1 = arith.constant 0 : index
    %c0_2 = arith.constant 0 : index
    %0 = vector.load %arg2[%c0, %c0_0, %c0_1, %c0_2] : memref<1x1x4x256xf32, #tpu.memory_space<vmem>>, vector<1x1x4x256xf32>
    %1 = vector.shape_cast %0 : vector<1x1x4x256xf32> to vector<1x4x256xf32>
    %cst = arith.constant dense<0.000000e+00> : vector<4x256xf32>
    %2 = vector.multi_reduction <add>, %1, %cst [0] : vector<1x4x256xf32> to vector<4x256xf32>
    %cst_3 = arith.constant dense<0.000000e+00> : vector<4xf32>
    %3 = vector.multi_reduction <add>, %2, %cst_3 [1] : vector<4x256xf32> to vector<4xf32>
    %4 = vector.shape_cast %3 : vector<4xf32> to vector<4x1xf32>
    %cst_4 = arith.constant 3.906250e-03 : f32
    %5 = vector.broadcast %cst_4 : f32 to vector<4x1xf32>
    %6 = arith.mulf %4, %5 : vector<4x1xf32>
    %7 = vector.shape_cast %6 : vector<4x1xf32> to vector<1x4x1xf32>
    %8 = vector.broadcast %7 : vector<1x4x1xf32> to vector<1x4x256xf32>
    %9 = arith.subf %1, %8 : vector<1x4x256xf32>
    %10 = arith.mulf %9, %9 : vector<1x4x256xf32>
    %cst_5 = arith.constant dense<0.000000e+00> : vector<4x256xf32>
    %11 = vector.multi_reduction <add>, %10, %cst_5 [0] : vector<1x4x256xf32> to vector<4x256xf32>
    %cst_6 = arith.constant dense<0.000000e+00> : vector<4xf32>
    %12 = vector.multi_reduction <add>, %11, %cst_6 [1] : vector<4x256xf32> to vector<4xf32>
    %13 = vector.shape_cast %12 : vector<4xf32> to vector<4x1xf32>
    %cst_7 = arith.constant 3.906250e-03 : f32
    %14 = vector.broadcast %cst_7 : f32 to vector<4x1xf32>
    %15 = arith.mulf %13, %14 : vector<4x1xf32>
    %c0_8 = arith.constant 0 : index
    %c0_9 = arith.constant 0 : index
    %c0_10 = arith.constant 0 : index
    %c0_11 = arith.constant 0 : index
    %16 = vector.load %arg1[%c0_8, %c0_9, %c0_10, %c0_11] : memref<1x2x4x1xf32, #tpu.memory_space<vmem>>, vector<1x1x4x1xf32>
    %17 = vector.shape_cast %16 : vector<1x1x4x1xf32> to vector<4x1xf32>
    %c0_12 = arith.constant 0 : index
    %c1 = arith.constant 1 : index
    %c0_13 = arith.constant 0 : index
    %c0_14 = arith.constant 0 : index
    %18 = vector.load %arg1[%c0_12, %c1, %c0_13, %c0_14] : memref<1x2x4x1xf32, #tpu.memory_space<vmem>>, vector<1x1x4x1xf32>
    %19 = vector.shape_cast %18 : vector<1x1x4x1xf32> to vector<4x1xf32>
    %cst_15 = arith.constant 9.99999974E-6 : f32
    %20 = vector.broadcast %cst_15 : f32 to vector<4x1xf32>
    %21 = arith.addf %15, %20 : vector<4x1xf32>
    %22 = math.rsqrt %21 : vector<4x1xf32>
    %23 = arith.mulf %17, %22 : vector<4x1xf32>
    %24 = vector.shape_cast %23 : vector<4x1xf32> to vector<1x4x1xf32>
    %25 = vector.broadcast %24 : vector<1x4x1xf32> to vector<1x4x256xf32>
    %26 = arith.mulf %9, %25 : vector<1x4x256xf32>
    %27 = vector.shape_cast %19 : vector<4x1xf32> to vector<1x4x1xf32>
    %28 = vector.broadcast %27 : vector<1x4x1xf32> to vector<1x4x256xf32>
    %29 = arith.addf %26, %28 : vector<1x4x256xf32>
    %c0_16 = arith.constant 0 : index
    %c0_17 = arith.constant 0 : index
    %c0_18 = arith.constant 0 : index
    %c0_19 = arith.constant 0 : index
    %30 = vector.load %arg3[%c0_16, %c0_17, %c0_18, %c0_19] : memref<1x1x4x256xf32, #tpu.memory_space<vmem>>, vector<1x1x4x256xf32>
    %31 = vector.shape_cast %30 : vector<1x1x4x256xf32> to vector<1x4x256xf32>
    %32 = vector.shape_cast %29 : vector<1x4x256xf32> to vector<1x1x4x256xf32>
    tpu.vector_store %arg3[%c0_16, %c0_17, %c0_18, %c0_19], %32 {strides = array<i32>} : memref<1x1x4x256xf32, #tpu.memory_space<vmem>>, vector<1x1x4x256xf32>,
    return
  }
  func.func @transform_0(%arg0: i32) -> (i32, i32, i32, i32) {
    %c0_i32 = arith.constant 0 : i32
    %c0_i32_0 = arith.constant 0 : i32
    %c0_i32_1 = arith.constant 0 : i32
    %c0_i32_2 = arith.constant 0 : i32
    return %arg0, %c0_i32, %c0_i32_0, %c0_i32_1 : i32, i32, i32, i32
  }
  func.func @transform_1(%arg0: i32) -> (i32, i32, i32, i32) {
    %c0_i32 = arith.constant 0 : i32
    %c0_i32_0 = arith.constant 0 : i32
    %c0_i32_1 = arith.constant 0 : i32
    %c0_i32_2 = arith.constant 0 : i32
    return %arg0, %c0_i32, %c0_i32_0, %c0_i32_1 : i32, i32, i32, i32
  }
  func.func @transform_2(%arg0: i32) -> (i32, i32, i32, i32) {
    %c0_i32 = arith.constant 0 : i32
    %c0_i32_0 = arith.constant 0 : i32
    %c0_i32_1 = arith.constant 0 : i32
    %c0_i32_2 = arith.constant 0 : i32
    return %arg0, %c0_i32, %c0_i32_0, %c0_i32_1 : i32, i32, i32, i32
  }
}

</mosaic_0001>

<llo_original>
// kernel: tpu_custom_call.1
$region0: #{tpu_custom_call.1}
  #allocation0 [shape = 'u32[]', space=smem, size = 0x4, offset = 0x4, fixed_abs, tag = 'smem constant byte address 0x4 - core index']
  #allocation1 [shape = 'u32[144,128]{1,0:T(1,128)}', space=vmem, size = 0x12000, scoped, tag = 'internal scratch']
  %s0 = inlined_call_operand.vmem [shape: f32[2,2,4,1], index: 0, kind: input, shape index: {}]
  %s1 = inlined_call_operand.vmem [shape: f32[2,1,4,256], index: 1, kind: input, shape index: {}]
  %s2 = inlined_call_operand.hbm [shape: f32[2,1,4,256], index: 2, kind: output, shape index: {}]
  %s3 = sld [smem:[#allocation0]]
  $region41: #{tpu_custom_call.1} parent=0
    _
  %s5 = ssub.s32 1, %s3
  %s6 = scalar_select 0, %s5, %s3
  $region1: #{tpu_custom_call.1} parent=0
    #allocation2 [shape = 'u8[8192]{0}', space=vmem, size = 0x2000, scoped, tag = 'output window, operand 0']
    #allocation3 [shape = 's32[2]{0}', space=sflag, size = 0x8, scoped, tag = 'scoped memory for tpu_custom_call.1']
    %7 = vsyncpa [#allocation3], 0
    %s8 = scalar_lea.sflag [#allocation3], 1
    %9 = vsyncpa %s8, 0
    loop: start=0, step=1, limit=4
    $region2: #{tpu_custom_call.1} parent=1 // loop_pre_header
      _
    $region3: #{tpu_custom_call.1} parent=1 // loop_header
      %s11 = sphi 0, %s15
      %p12 = scmp.ge.s32.totalorder %s11, 4
      %s21 = sphi 0, %s23
      %s24 = sphi 0, %s21
      %s25 = sphi 0, %s24
      %s41 = sphi 0, %s25
      %s47 = sphi 0, %s49
      %s50 = sphi 0, %s47
      %s51 = sphi 0, %s50
      %s67 = sphi 0, %s51
      %s73 = sphi 0, %s75
      %s76 = sphi 0, %s73
      %s77 = sphi 0, %s76
      %s93 = sphi 0, %s77
    $region4: #{tpu_custom_call.1} parent=1 // loop_header_branch
      %14 = sbr.rel (%p12) target = $region8
    $region5: #{tpu_custom_call.1} parent=1 // loop_body
      %s16 = ssub.s32 %s11, 1
      %s17 = ssub.s32 %s11, 2
      %s18 = sadd.s32 %s11, 1
      %s19 = ssub.s32 %s11, %s18
      %p20 = scmp.eq.s32.totalorder %s19, 0
      %s22 = sadd.s32 %s21, 1
      %s23 = scalar_select %p20, %s21, %s22
      %p26 = pneg %p20
      %p27 = scmp.eq.s32.totalorder %s11, 1
      %p28 = por %p26, %p27
      %p29 = scmp.ne.s32.totalorder %s21, %s24
      %p30 = scmp.eq.s32.totalorder %s11, 0
      %p31 = por %p29, %p30
      %p32 = scmp.ne.s32.totalorder %s21, %s24
      %p33 = scmp.eq.s32.totalorder %s16, 1
      %p34 = por %p32, %p33
      %p35 = scmp.ne.s32.totalorder %s24, %s25
      %p36 = scmp.eq.s32.totalorder %s16, 0
      %p37 = por %p35, %p36
      %p38 = scmp.ne.s32.totalorder %s24, %s25
      %p39 = scmp.eq.s32.totalorder %s17, 1
      %p40 = por %p38, %p39
      %p42 = scmp.ne.s32.totalorder %s25, %s41
      %p43 = scmp.eq.s32.totalorder %s17, 0
      %p44 = por %p42, %p43
      %s45 = ssub.s32 %s11, %s18
      %p46 = scmp.eq.s32.totalorder %s45, 0
      %s48 = sadd.s32 %s47, 1
      %s49 = scalar_select %p46, %s47, %s48
      %p52 = pneg %p46
      %p53 = scmp.eq.s32.totalorder %s11, 1
      %p54 = por %p52, %p53
      %p55 = scmp.ne.s32.totalorder %s47, %s50
      %p56 = scmp.eq.s32.totalorder %s11, 0
      %p57 = por %p55, %p56
      %p58 = scmp.ne.s32.totalorder %s47, %s50
      %p59 = scmp.eq.s32.totalorder %s16, 1
      %p60 = por %p58, %p59
      %p61 = scmp.ne.s32.totalorder %s50, %s51
      %p62 = scmp.eq.s32.totalorder %s16, 0
      %p63 = por %p61, %p62
      %p64 = scmp.ne.s32.totalorder %s50, %s51
      %p65 = scmp.eq.s32.totalorder %s17, 1
      %p66 = por %p64, %p65
      %p68 = scmp.ne.s32.totalorder %s51, %s67
      %p69 = scmp.eq.s32.totalorder %s17, 0
      %p70 = por %p68, %p69
      %s71 = ssub.s32 %s11, %s18
      %p72 = scmp.eq.s32.totalorder %s71, 0
      %s74 = sadd.s32 %s73, 1
      %s75 = scalar_select %p72, %s73, %s74
      %p78 = pneg %p72
      %p79 = scmp.eq.s32.totalorder %s11, 1
      %p80 = por %p78, %p79
      %p81 = scmp.ne.s32.totalorder %s73, %s76
      %p82 = scmp.eq.s32.totalorder %s11, 0
      %p83 = por %p81, %p82
      %p84 = scmp.ne.s32.totalorder %s73, %s76
      %p85 = scmp.eq.s32.totalorder %s16, 1
      %p86 = por %p84, %p85
      %p87 = scmp.ne.s32.totalorder %s76, %s77
      %p88 = scmp.eq.s32.totalorder %s16, 0
      %p89 = por %p87, %p88
      %p90 = scmp.ne.s32.totalorder %s76, %s77
      %p91 = scmp.eq.s32.totalorder %s17, 1
      %p92 = por %p90, %p91
      %p94 = scmp.ne.s32.totalorder %s77, %s93
      %p95 = scmp.eq.s32.totalorder %s17, 0
      %p96 = por %p94, %p95
      %p97 = scmp.le.s32.totalorder 1, %s11
      %p98 = scmp.lt.s32.totalorder %s11, 3
      %p99 = pnand %p97, %p98
      %p100 = pneg %p99
      // Predicated region
      $region9: #{tpu_custom_call.1} parent=5 // pred_check
        _
      $region10: #{tpu_custom_call.1} parent=5 // pred_check_branch
        %102 = sbr.rel (%p99) target = $region12
      $region11: #{tpu_custom_call.1} parent=5 // pred_region
        %s103 = ssub.s32 %s11, 1
      $region12: #{tpu_custom_call.1} parent=5 // pred_fallthru
        _
      %p104 = scmp.lt.s32.totalorder %s11, 2
      // Predicated region
      $region13: #{tpu_custom_call.1} parent=5 // pred_check
        %p105 = pneg %p104
      $region14: #{tpu_custom_call.1} parent=5 // pred_check_branch
        %107 = sbr.rel (%p105) target = $region16
      $region15: #{tpu_custom_call.1} parent=5 // pred_region
        // Predicated region
        $region17: #{tpu_custom_call.1} parent=15 // pred_check
          %p108 = pneg %p31
        $region18: #{tpu_custom_call.1} parent=15 // pred_check_branch
          %110 = sbr.rel (%p108) target = $region20
        $region19: #{tpu_custom_call.1} parent=15 // pred_region
          %p111 = scmp.lt.s32.totalorder %s11, 1
          %s112 = scalar_select %p111, %s11, 1
          %s113 = smul.addr %s112, 2
          %s114 = smul.addr %s113, 4
          %s115 = scalar_lea.vmem %s0, %s114
        $region20: #{tpu_custom_call.1} parent=15 // pred_fallthru
          _
        // Predicated region
        $region21: #{tpu_custom_call.1} parent=15 // pred_check
          %p116 = pneg %p57
        $region22: #{tpu_custom_call.1} parent=15 // pred_check_branch
          %118 = sbr.rel (%p116) target = $region24
        $region23: #{tpu_custom_call.1} parent=15 // pred_region
          %p119 = scmp.lt.s32.totalorder %s11, 1
          %s120 = scalar_select %p119, %s11, 1
          %s121 = smul.addr %s120, 2
          %s122 = smul.addr %s121, 4
          %s123 = scalar_lea.vmem %s1, %s122
        $region24: #{tpu_custom_call.1} parent=15 // pred_fallthru
          _
      $region16: #{tpu_custom_call.1} parent=5 // pred_fallthru
        _
      %p124 = scmp.le.s32.totalorder 1, %s11
      %p125 = scmp.lt.s32.totalorder %s11, 3
      %p126 = pnand %p124, %p125
      %p127 = pneg %p126
      // Predicated region
      $region25: #{tpu_custom_call.1} parent=5 // pred_check
        _
      $region26: #{tpu_custom_call.1} parent=5 // pred_check_branch
        %129 = sbr.rel (%p126) target = $region28
      $region27: #{tpu_custom_call.1} parent=5 // pred_region
        %s130 = ssub.s32 %s11, 1
        %p131 = scmp.lt.s32.totalorder %s16, 1
        %s132 = scalar_select %p131, %s16, 1
        %s133 = smul.addr %s132, 2
        %s134 = smul.addr %s133, 4
        %s135 = scalar_lea.vmem %s0, %s134
        %p136 = pneg %p37
        %p137 = pneg %p34
        %p138 = scmp.lt.s32.totalorder %s16, 1
        %s139 = scalar_select %p138, %s16, 1
        %s140 = smul.addr %s139, 2
        %s141 = smul.addr %s140, 4
        %s142 = scalar_lea.vmem %s1, %s141
        %p143 = pneg %p63
        %p144 = pneg %p60
        %p145 = pneg %p89
        %p146 = pneg %p86
        %s147 = sand.u32 %s76, 1
        %s148 = scalar_lea.sflag [#allocation3], %s147
        %s149 = sand.u32 %s76, 1
        %s150 = smul.addr %s149, 8
        %s151 = scalar_lea.vmem [#allocation2], %s150
        %p152 = scmp.lt.s32.totalorder %s16, 1
        %s153 = scalar_select %p152, %s16, 1
        %s154 = smul.addr %s153, 2
        %s155 = smul.addr %s154, 4
        %s156 = scalar_lea.vmem %s0, %s155
        %p157 = scmp.lt.s32.totalorder %s16, 1
        %s158 = scalar_select %p157, %s16, 1
        %s159 = smul.addr %s158, 2
        %s160 = smul.addr %s159, 4
        %s161 = scalar_lea.vmem %s1, %s160
        %v162 = vld [vmem:[%s161] sm:$0xff]
        %v163 = vadd.f32 %v162, 0.0
        %v165 = vcombine.high %v163, %v163
        %vm167 = vcmask 1043456
        %v168 = vsel %vm167, %v163, 0.0
        %v169 = vsel %vm167, %v165, 0.0
        %v170 = vadd.f32 %v168, %v169
        %171 = vadd.xlane.f32.xlu0 %v170
        %v172 = vpop.xlane.xlu0 %171
        %v173 = vmul.f32 %v172, 0.00390625
        %v176 = vunpack.c.l.s4 839922192
        %v177 = vunpack.c.0.s8 %v176
        %v178 = vlaneseq
        %v179 = vshrl.u32 %v178, 7
        %v180 = vsub.s32 %v177, %v179
        %v181 = vrot.slane %v173, %v180
        %v183 = vsub.f32 %v162, %v181
        %v184 = vmul.f32 %v183, %v183
        %v185 = vadd.f32 %v184, 0.0
        %v187 = vcombine.high %v185, %v185
        %v189 = vsel %vm167, %v185, 0.0
        %v190 = vsel %vm167, %v187, 0.0
        %v191 = vadd.f32 %v189, %v190
        %192 = vadd.xlane.f32.xlu0 %v191
        %v193 = vpop.xlane.xlu0 %192
        %v194 = vmul.f32 %v193, 0.00390625
        %v195 = vld [vmem:[%s156] sm:$0xf]
        %s196 = scalar_lea.vmem %s156, 4
        %v197 = vld [vmem:[%s196] sm:$0xf]
        %v198 = vadd.f32 %v194, 1e-05
        %v199 = vrsqrt.pop %v198
        %v200 = vmul.f32 %v195, %v199
        %202 = vset.pattern.permute.xlu0 0
        %203 = vperm.xlu0 %202, %v200
        %v204 = vpop.permute.xlu0 %203
        %v206 = vunpack.c.l.s4 839922192
        %v207 = vunpack.c.0.s8 %v206
        %v208 = vlaneseq
        %v209 = vshrl.u32 %v208, 7
        %v210 = vsub.s32 %v207, %v209
        %v211 = vrot.slane %v204, %v210
        %v213 = vmul.f32 %v183, %v211
        %215 = vset.pattern.permute.xlu0 0
        %216 = vperm.xlu0 %215, %v197
        %v217 = vpop.permute.xlu0 %216
        %v219 = vunpack.c.l.s4 839922192
        %v220 = vunpack.c.0.s8 %v219
        %v221 = vlaneseq
        %v222 = vshrl.u32 %v221, 7
        %v223 = vsub.s32 %v220, %v222
        %v224 = vrot.slane %v217, %v223
        %v226 = vadd.f32 %v213, %v224
        %227 = vst [vmem:[%s151] sm:$0xff] %v226
        %s228 = sand.u32 %s76, 1
        %s229 = scalar_lea.sflag [#allocation3], %s228
        %s230 = sand.u32 %s76, 1
        %s231 = smul.addr %s230, 8
        %s232 = scalar_lea.vmem [#allocation2], %s231
        // Predicated region
        $region29: #{tpu_custom_call.1} parent=27 // pred_check
          %p233 = pneg %p86
        $region30: #{tpu_custom_call.1} parent=27 // pred_check_branch
          %235 = sbr.rel (%p233) target = $region32
        $region31: #{tpu_custom_call.1} parent=27 // pred_region
          %s237 = ssub.s32 128, 128
          %238 = vsyncadd %s229, %s237
          %s239 = smul.addr %s16, 2
          %s240 = smul.addr %s239, 64
          %s241 = scalar_lea.hbm %s2, %s240
          %s243 = sshll.u32 %s232, 4
          %s244 = int_to_ptr.vmem [resolvable:$true] %s243
          %246 = dma.vmem_to_hbm [thread:$0]  %s244, 128, %s241, %s229
        $region32: #{tpu_custom_call.1} parent=27 // pred_fallthru
          _
      $region28: #{tpu_custom_call.1} parent=5 // pred_fallthru
        _
      %p247 = scmp.le.s32.totalorder 2, %s11
      // Predicated region
      $region33: #{tpu_custom_call.1} parent=5 // pred_check
        %p248 = pneg %p247
      $region34: #{tpu_custom_call.1} parent=5 // pred_check_branch
        %250 = sbr.rel (%p248) target = $region36
      $region35: #{tpu_custom_call.1} parent=5 // pred_region
        %s251 = ssub.s32 %s11, 2
        // Predicated region
        $region37: #{tpu_custom_call.1} parent=35 // pred_check
          %p252 = pneg %p92
        $region38: #{tpu_custom_call.1} parent=35 // pred_check_branch
          %254 = sbr.rel (%p252) target = $region40
        $region39: #{tpu_custom_call.1} parent=35 // pred_region
          %s255 = sand.u32 %s77, 1
          %s256 = scalar_lea.sflag [#allocation3], %s255
          %s257 = sand.u32 %s77, 1
          %s258 = smul.addr %s257, 8
          %s259 = scalar_lea.vmem [#allocation2], %s258
          %260 = dma.done %s256, 128
        $region40: #{tpu_custom_call.1} parent=35 // pred_fallthru
          _
      $region36: #{tpu_custom_call.1} parent=5 // pred_fallthru
        _
    $region6: #{tpu_custom_call.1} parent=1 // loop_footer
      %s15 = sadd.s32 1, %s11
    $region7: #{tpu_custom_call.1} parent=1 // loop_footer_branch
      %10 = sbr.rel target = $region3
    $region8: #{tpu_custom_call.1} parent=1 // loop_exit
      _
    %261 = vsyncpa [#allocation3], 1
    %s262 = scalar_lea.sflag [#allocation3], 1
    %263 = vsyncpa %s262, 1

</llo_original>
